<compile_context>
chip_gen: v7x
topology: tpu7x:2x2x1
jax: 0.10.0
libtpu: 0.0.40
codegen_flags: <defaults>
</compile_context>

<pallas_src>
import jax
import jax.numpy as jnp
from jax.experimental import pallas as pl
from jax.experimental.pallas import tpu as pltpu

IN_FEATURES = 4
OUT_FEATURES = 2
LANES = 128
GROUP = LANES // OUT_FEATURES          # 64 original rows per lane-dense chunk-row
X_WIDTH = GROUP * IN_FEATURES          # 256 input lanes per chunk-row
O_WIDTH = GROUP * OUT_FEATURES         # 128 output lanes per chunk-row
TILE_ROWS_MAX = 8192                   # chunk-rows/tile: ~24 MiB double-buffered in+out
SMALL_M = 8192                         # below this many rows, skip pallas entirely
VMEM_LIMIT_BYTES = 48 * 1024 * 1024


def _round_up(a, b):
    return (a + b - 1) // b * b


def _linear_relu_kernel(x_ref, w_ref, b_ref, o_ref):
    # x_ref: VMEM (tile_rows, 256)   lane-dense input chunk
    # w_ref: VMEM (256, 128)         block-diagonal W^T (resident, tiny)
    # b_ref: VMEM (1, 128)           tiled bias
    # o_ref: VMEM (tile_rows, 128)   lane-dense output chunk
    acc = jnp.dot(x_ref[...], w_ref[...], preferred_element_type=jnp.float32)
    o_ref[...] = jnp.maximum(acc + b_ref[...], 0.0).astype(o_ref.dtype)


def linear_relu(x, weight, bias):
    """x: (..., 4) float32; weight: (2, 4); bias: (2,). Returns (..., 2)."""
    *lead, k = x.shape
    assert k == IN_FEATURES
    m = 1
    for d in lead:
        m *= d
    x2d = x.reshape(m, k)

    # Small-M fast path: launch overhead would dominate; let XLA fuse it.
    if m < SMALL_M:
        out2d = jnp.maximum(x2d @ weight.T + bias, 0.0)
        return out2d.reshape(*lead, OUT_FEATURES)

    # --- transpose-free grouping: (M, 4) -> (rows, 256), all contiguous ---
    rows = -(-m // GROUP)
    tile_rows = min(TILE_ROWS_MAX, _round_up(rows, 8))
    # Keep grid length >= 2 so the "parallel" axis can shard across TensorCores.
    if _round_up(rows, tile_rows) // tile_rows < 2 and tile_rows > 8:
        tile_rows = max(8, _round_up(-(-tile_rows // 2), 8))
    rows_pad = _round_up(rows, tile_rows)
    m_pad = rows_pad * GROUP

    if m_pad != m:
        x2d = jnp.pad(x2d, ((0, m_pad - m), (0, 0)))
    x_grp = x2d.reshape(rows_pad, X_WIDTH)          # free, contiguous reshape

    # Block-diagonal weight (256, 128): 64 copies of W^T; tiled bias (1, 128).
    eye = jnp.eye(GROUP, dtype=x.dtype)
    w_bd = jnp.einsum("gh,kn->gkhn", eye,
                      weight.T.astype(x.dtype)).reshape(X_WIDTH, O_WIDTH)
    b_tiled = jnp.tile(bias.astype(x.dtype), GROUP).reshape(1, O_WIDTH)

    grid = (rows_pad // tile_rows,)

    out_grp = pl.pallas_call(
        _linear_relu_kernel,
        out_shape=jax.ShapeDtypeStruct((rows_pad, O_WIDTH), x.dtype),
        grid=grid,
        in_specs=[
            pl.BlockSpec((tile_rows, X_WIDTH), lambda i: (i, 0)),
            pl.BlockSpec((X_WIDTH, O_WIDTH), lambda i: (0, 0)),
            pl.BlockSpec((1, O_WIDTH), lambda i: (0, 0)),
        ],
        out_specs=pl.BlockSpec((tile_rows, O_WIDTH), lambda i: (i, 0)),
        compiler_params=pltpu.CompilerParams(
            dimension_semantics=("parallel",),
            vmem_limit_bytes=VMEM_LIMIT_BYTES),
    )(x_grp, w_bd, b_tiled)

    # Padded tail rows evaluate to relu(bias); the [:m] slice removes them.
    out2d = out_grp.reshape(m_pad, OUT_FEATURES)[:m]   # free reshape + slice
    return out2d.reshape(*lead, OUT_FEATURES)


if __name__ == "__main__":
    key = jax.random.PRNGKey(0)
    kx, kw, kb, kx2 = jax.random.split(key, 4)

    # Deterministic params (mimics nn.Linear uniform(-1/sqrt(K), 1/sqrt(K))).
    bound = 1.0 / (IN_FEATURES ** 0.5)
    weight = jax.random.uniform(kw, (OUT_FEATURES, IN_FEATURES),
                                dtype=jnp.float32, minval=-bound, maxval=bound)
    bias = jax.random.uniform(kb, (OUT_FEATURES,),
                              dtype=jnp.float32, minval=-bound, maxval=bound)

    # 1) Module-spec shape (last dim = in_features = 4): tiny M -> fast path.
    x_small = jax.random.normal(kx, (2, 1, 2, IN_FEATURES), dtype=jnp.float32)
    out_small = linear_relu(x_small, weight, bias)
    jax.block_until_ready(out_small)
    ref_small = jnp.maximum(
        jnp.einsum("...k,nk->...n", x_small, weight,
                   precision=jax.lax.Precision.HIGHEST) + bias, 0.0)
    assert out_small.shape == (2, 1, 2, OUT_FEATURES)
    assert jnp.allclose(out_small, ref_small, atol=2e-2), "small-M mismatch"

    # 2) Larger M (64*320 = 20480 rows) -> exercises the Pallas kernel path.
    x_large = jax.random.normal(kx2, (64, 320, IN_FEATURES), dtype=jnp.float32)
    out_large = linear_relu(x_large, weight, bias)
    jax.block_until_ready(out_large)
    ref_large = jnp.maximum(
        jnp.einsum("...k,nk->...n", x_large, weight,
                   precision=jax.lax.Precision.HIGHEST) + bias, 0.0)
    assert out_large.shape == (64, 320, OUT_FEATURES)
    assert jnp.allclose(out_large, ref_large, atol=2e-2), "pallas path mismatch"

    print("KERNEL_OK")
</pallas_src>

<mosaic_0001>
module attributes {stable_mosaic.version = 11 : i64} {
  func.func @_linear_relu_kernel(%arg0: i32, %arg1: memref<160x256xf32, #tpu.memory_space<vmem>>, %arg2: memref<256x128xf32, #tpu.memory_space<vmem>>, %arg3: memref<1x128xf32, #tpu.memory_space<vmem>>, %arg4: memref<160x128xf32, #tpu.memory_space<vmem>>) attributes {dimension_semantics = [#tpu.dimension_semantics<parallel>], iteration_bounds = array<i64: 2>, scalar_prefetch = 0 : i64, scratch_operands = 0 : i64, tpu.core_type = #tpu.core_type<tc>, window_params = [{transform_indices = @transform_0, window_bounds = array<i64: 160, 256>}, {pipeline_mode = #tpu.pipeline_mode<synchronous>, transform_indices = @transform_1, window_bounds = array<i64: 256, 128>}, {pipeline_mode = #tpu.pipeline_mode<synchronous>, transform_indices = @transform_2, window_bounds = array<i64: 1, 128>}, {transform_indices = @transform_3, window_bounds = array<i64: 160, 128>}]} {
    %c0 = arith.constant 0 : index
    %c0_0 = arith.constant 0 : index
    %0 = vector.load %arg1[%c0, %c0_0] : memref<160x256xf32, #tpu.memory_space<vmem>>, vector<160x256xf32>
    %c0_1 = arith.constant 0 : index
    %c0_2 = arith.constant 0 : index
    %1 = vector.load %arg2[%c0_1, %c0_2] : memref<256x128xf32, #tpu.memory_space<vmem>>, vector<256x128xf32>
    %cst = arith.constant dense<0.000000e+00> : vector<160x128xf32>
    %2 = tpu.matmul %0, %1, %cst {dimension_numbers = #tpu.dot_dimension_numbers<[1], [0], [0], [1], [0, 0, 1, 1], [], []>} : vector<160x256xf32>, vector<256x128xf32>, vector<160x128xf32> -> vector<160x128xf32>
    %c0_3 = arith.constant 0 : index
    %c0_4 = arith.constant 0 : index
    %3 = vector.load %arg3[%c0_3, %c0_4] : memref<1x128xf32, #tpu.memory_space<vmem>>, vector<1x128xf32>
    %4 = vector.broadcast %3 : vector<1x128xf32> to vector<160x128xf32>
    %5 = arith.addf %2, %4 : vector<160x128xf32>
    %cst_5 = arith.constant 0.000000e+00 : f32
    %6 = vector.broadcast %cst_5 : f32 to vector<160x128xf32>
    %7 = arith.maximumf %5, %6 : vector<160x128xf32>
    %c0_6 = arith.constant 0 : index
    %c0_7 = arith.constant 0 : index
    %8 = vector.load %arg4[%c0_6, %c0_7] : memref<160x128xf32, #tpu.memory_space<vmem>>, vector<160x128xf32>
    tpu.vector_store %arg4[%c0_6, %c0_7], %7 {strides = array<i32>} : memref<160x128xf32, #tpu.memory_space<vmem>>, vector<160x128xf32>,
    return
  }
  func.func @transform_0(%arg0: i32) -> (i32, i32) {
    %c0_i32 = arith.constant 0 : i32
    %c0_i32_0 = arith.constant 0 : i32
    return %arg0, %c0_i32 : i32, i32
  }
  func.func @transform_1(%arg0: i32) -> (i32, i32) {
    %c0_i32 = arith.constant 0 : i32
    %c0_i32_0 = arith.constant 0 : i32
    %c0_i32_1 = arith.constant 0 : i32
    return %c0_i32, %c0_i32_0 : i32, i32
  }
  func.func @transform_2(%arg0: i32) -> (i32, i32) {
    %c0_i32 = arith.constant 0 : i32
    %c0_i32_0 = arith.constant 0 : i32
    %c0_i32_1 = arith.constant 0 : i32
    return %c0_i32, %c0_i32_0 : i32, i32
  }
  func.func @transform_3(%arg0: i32) -> (i32, i32) {
    %c0_i32 = arith.constant 0 : i32
    %c0_i32_0 = arith.constant 0 : i32
    return %arg0, %c0_i32 : i32, i32
  }
}

</mosaic_0001>

<llo_original>
// kernel: tpu_custom_call.1
$region0: #{tpu_custom_call.1}
  #allocation0 [shape = 'u32[]', space=smem, size = 0x4, offset = 0x4, fixed_abs, tag = 'smem constant byte address 0x4 - core index']
  #allocation1 [shape = 'u32[144,128]{1,0:T(1,128)}', space=vmem, size = 0x12000, scoped, tag = 'internal scratch']
  %s0 = inlined_call_operand.hbm [shape: f32[320,256], index: 0, kind: input, shape index: {}]
  %s1 = inlined_call_operand.hbm [shape: f32[256,128], index: 1, kind: input, shape index: {}]
  %s2 = inlined_call_operand.vmem [shape: f32[1,128], index: 2, kind: input, shape index: {}]
  %s3 = inlined_call_operand.hbm [shape: f32[320,128], index: 3, kind: output, shape index: {}]
  %s4 = sld [smem:[#allocation0]]
  $region53: #{tpu_custom_call.1} parent=0
    _
  %s6 = ssub.s32 1, %s4
  %s7 = scalar_select 0, %s6, %s4
  $region1: #{tpu_custom_call.1} parent=0
    #allocation2 [shape = 'u8[327680]{0}', space=vmem, size = 0x50000, scoped, tag = 'input window, operand 0']
    #allocation3 [shape = 's32[2]{0}', space=sflag, size = 0x8, scoped, tag = 'scoped memory for tpu_custom_call.1']
    #allocation4 [shape = 's32[2]{0}', space=sflag, size = 0x8, scoped, tag = 'scoped memory for tpu_custom_call.1']
    #allocation5 [shape = 'u8[131072]{0}', space=vmem, size = 0x20000, scoped, tag = 'input window, operand 1, single buffered']
    #allocation6 [shape = 's32[1]{0}', space=sflag, size = 0x4, scoped, tag = 'scoped memory for tpu_custom_call.1']
    #allocation7 [shape = 'u8[163840]{0}', space=vmem, size = 0x28000, scoped, tag = 'output window, operand 0']
    %8 = vsyncpa [#allocation3], 0
    %s9 = scalar_lea.sflag [#allocation3], 1
    %10 = vsyncpa %s9, 0
    %11 = vsyncpa [#allocation6], 0
    %12 = vsyncpa [#allocation4], 0
    %s13 = scalar_lea.sflag [#allocation4], 1
    %14 = vsyncpa %s13, 0
    loop: start=0, step=1, limit=4
    $region2: #{tpu_custom_call.1} parent=1 // loop_pre_header
      _
    $region3: #{tpu_custom_call.1} parent=1 // loop_header
      %s16 = sphi 0, %s20
      %p17 = scmp.ge.s32.totalorder %s16, 4
      %s26 = sphi 0, %s28
      %s29 = sphi 0, %s26
      %s30 = sphi 0, %s29
      %s46 = sphi 0, %s30
      %s50 = sphi 0, %s50
      %s52 = sphi 0, %s50
      %s53 = sphi 0, %s52
      %s67 = sphi 0, %s53
      %s71 = sphi 0, %s71
      %s73 = sphi 0, %s71
      %s74 = sphi 0, %s73
      %s88 = sphi 0, %s74
      %s94 = sphi 0, %s96
      %s97 = sphi 0, %s94
      %s98 = sphi 0, %s97
      %s114 = sphi 0, %s98
    $region4: #{tpu_custom_call.1} parent=1 // loop_header_branch
      %19 = sbr.rel (%p17) target = $region8
    $region5: #{tpu_custom_call.1} parent=1 // loop_body
      %s21 = ssub.s32 %s16, 1
      %s22 = ssub.s32 %s16, 2
      %s23 = sadd.s32 %s16, 1
      %s24 = ssub.s32 %s16, %s23
      %p25 = scmp.eq.s32.totalorder %s24, 0
      %s27 = sadd.s32 %s26, 1
      %s28 = scalar_select %p25, %s26, %s27
      %p31 = pneg %p25
      %p32 = scmp.eq.s32.totalorder %s16, 1
      %p33 = por %p31, %p32
      %p34 = scmp.ne.s32.totalorder %s26, %s29
      %p35 = scmp.eq.s32.totalorder %s16, 0
      %p36 = por %p34, %p35
      %p37 = scmp.ne.s32.totalorder %s26, %s29
      %p38 = scmp.eq.s32.totalorder %s21, 1
      %p39 = por %p37, %p38
      %p40 = scmp.ne.s32.totalorder %s29, %s30
      %p41 = scmp.eq.s32.totalorder %s21, 0
      %p42 = por %p40, %p41
      %p43 = scmp.ne.s32.totalorder %s29, %s30
      %p44 = scmp.eq.s32.totalorder %s22, 1
      %p45 = por %p43, %p44
      %p47 = scmp.ne.s32.totalorder %s30, %s46
      %p48 = scmp.eq.s32.totalorder %s22, 0
      %p49 = por %p47, %p48
      %s51 = sadd.s32 %s50, 1
      %p54 = scmp.eq.s32.totalorder %s16, 1
      %p55 = scmp.ne.s32.totalorder %s50, %s52
      %p56 = scmp.eq.s32.totalorder %s16, 0
      %p57 = por %p55, %p56
      %p58 = scmp.ne.s32.totalorder %s50, %s52
      %p59 = scmp.eq.s32.totalorder %s21, 1
      %p60 = por %p58, %p59
      %p61 = scmp.ne.s32.totalorder %s52, %s53
      %p62 = scmp.eq.s32.totalorder %s21, 0
      %p63 = por %p61, %p62
      %p64 = scmp.ne.s32.totalorder %s52, %s53
      %p65 = scmp.eq.s32.totalorder %s22, 1
      %p66 = por %p64, %p65
      %p68 = scmp.ne.s32.totalorder %s53, %s67
      %p69 = scmp.eq.s32.totalorder %s22, 0
      %p70 = por %p68, %p69
      %s72 = sadd.s32 %s71, 1
      %p75 = scmp.eq.s32.totalorder %s16, 1
      %p76 = scmp.ne.s32.totalorder %s71, %s73
      %p77 = scmp.eq.s32.totalorder %s16, 0
      %p78 = por %p76, %p77
      %p79 = scmp.ne.s32.totalorder %s71, %s73
      %p80 = scmp.eq.s32.totalorder %s21, 1
      %p81 = por %p79, %p80
      %p82 = scmp.ne.s32.totalorder %s73, %s74
      %p83 = scmp.eq.s32.totalorder %s21, 0
      %p84 = por %p82, %p83
      %p85 = scmp.ne.s32.totalorder %s73, %s74
      %p86 = scmp.eq.s32.totalorder %s22, 1
      %p87 = por %p85, %p86
      %p89 = scmp.ne.s32.totalorder %s74, %s88
      %p90 = scmp.eq.s32.totalorder %s22, 0
      %p91 = por %p89, %p90
      %s92 = ssub.s32 %s16, %s23
      %p93 = scmp.eq.s32.totalorder %s92, 0
      %s95 = sadd.s32 %s94, 1
      %s96 = scalar_select %p93, %s94, %s95
      %p99 = pneg %p93
      %p100 = scmp.eq.s32.totalorder %s16, 1
      %p101 = por %p99, %p100
      %p102 = scmp.ne.s32.totalorder %s94, %s97
      %p103 = scmp.eq.s32.totalorder %s16, 0
      %p104 = por %p102, %p103
      %p105 = scmp.ne.s32.totalorder %s94, %s97
      %p106 = scmp.eq.s32.totalorder %s21, 1
      %p107 = por %p105, %p106
      %p108 = scmp.ne.s32.totalorder %s97, %s98
      %p109 = scmp.eq.s32.totalorder %s21, 0
      %p110 = por %p108, %p109
      %p111 = scmp.ne.s32.totalorder %s97, %s98
      %p112 = scmp.eq.s32.totalorder %s22, 1
      %p113 = por %p111, %p112
      %p115 = scmp.ne.s32.totalorder %s98, %s114
      %p116 = scmp.eq.s32.totalorder %s22, 0
      %p117 = por %p115, %p116
      %p118 = scmp.le.s32.totalorder 1, %s16
      %p119 = scmp.lt.s32.totalorder %s16, 3
      %p120 = pnand %p118, %p119
      %p121 = pneg %p120
      // Predicated region
      $region9: #{tpu_custom_call.1} parent=5 // pred_check
        _
      $region10: #{tpu_custom_call.1} parent=5 // pred_check_branch
        %123 = sbr.rel (%p120) target = $region12
      $region11: #{tpu_custom_call.1} parent=5 // pred_region
        %s124 = ssub.s32 %s16, 1
        // Predicated region
        $region13: #{tpu_custom_call.1} parent=11 // pred_check
          %p125 = pneg %p63
        $region14: #{tpu_custom_call.1} parent=11 // pred_check_branch
          %127 = sbr.rel (%p125) target = $region16
        $region15: #{tpu_custom_call.1} parent=11 // pred_region
          %s129 = ssub.s32 4096, 4096
          %130 = vsyncadd [#allocation6], %s129
          %s131 = sshll.u32 [#allocation5], 4
          %s132 = int_to_ptr.vmem [resolvable:$true] %s131
          %137 = dma.hbm_to_vmem [thread:$0]  %s1, 4096, %s132, [#allocation6], 128, 128, 8
        $region16: #{tpu_custom_call.1} parent=11 // pred_fallthru
          _
        // Predicated region
        $region17: #{tpu_custom_call.1} parent=11 // pred_check
          %p138 = pneg %p84
        $region18: #{tpu_custom_call.1} parent=11 // pred_check_branch
          %140 = sbr.rel (%p138) target = $region20
        $region19: #{tpu_custom_call.1} parent=11 // pred_region
          _
        $region20: #{tpu_custom_call.1} parent=11 // pred_fallthru
          _
      $region12: #{tpu_custom_call.1} parent=5 // pred_fallthru
        _
      %p141 = scmp.lt.s32.totalorder %s16, 2
      // Predicated region
      $region21: #{tpu_custom_call.1} parent=5 // pred_check
        %p142 = pneg %p141
      $region22: #{tpu_custom_call.1} parent=5 // pred_check_branch
        %144 = sbr.rel (%p142) target = $region24
      $region23: #{tpu_custom_call.1} parent=5 // pred_region
        // Predicated region
        $region25: #{tpu_custom_call.1} parent=23 // pred_check
          %p145 = pneg %p36
        $region26: #{tpu_custom_call.1} parent=23 // pred_check_branch
          %147 = sbr.rel (%p145) target = $region28
        $region27: #{tpu_custom_call.1} parent=23 // pred_region
          %s148 = sand.u32 %s26, 1
          %s149 = scalar_lea.sflag [#allocation3], %s148
          %s150 = sand.u32 %s26, 1
          %s151 = smul.addr %s150, 320
          %s152 = scalar_lea.vmem [#allocation2], %s151
          %s153 = smul.u32 20, %s16
          %s155 = ssub.s32 5120, 5120
          %156 = vsyncadd %s149, %s155
          %s157 = smul.addr %s153, 2
          %s158 = smul.addr %s157, 128
          %s159 = scalar_lea.hbm %s0, %s158
          %s160 = sshll.u32 %s152, 4
          %s161 = int_to_ptr.vmem [resolvable:$true] %s160
          %166 = dma.hbm_to_vmem [thread:$0]  %s159, 5120, %s161, %s149, 256, 256, 16
        $region28: #{tpu_custom_call.1} parent=23 // pred_fallthru
          _
      $region24: #{tpu_custom_call.1} parent=5 // pred_fallthru
        _
      %p167 = scmp.le.s32.totalorder 1, %s16
      %p168 = scmp.lt.s32.totalorder %s16, 3
      %p169 = pnand %p167, %p168
      %p170 = pneg %p169
      // Predicated region
      $region29: #{tpu_custom_call.1} parent=5 // pred_check
        _
      $region30: #{tpu_custom_call.1} parent=5 // pred_check_branch
        %172 = sbr.rel (%p169) target = $region32
      $region31: #{tpu_custom_call.1} parent=5 // pred_region
        %s173 = ssub.s32 %s16, 1
        %s174 = sand.u32 %s29, 1
        %s175 = scalar_lea.sflag [#allocation3], %s174
        %s176 = sand.u32 %s29, 1
        %s177 = smul.addr %s176, 320
        %s178 = scalar_lea.vmem [#allocation2], %s177
        // Predicated region
        $region33: #{tpu_custom_call.1} parent=31 // pred_check
          %p179 = pneg %p42
        $region34: #{tpu_custom_call.1} parent=31 // pred_check_branch
          %181 = sbr.rel (%p179) target = $region36
        $region35: #{tpu_custom_call.1} parent=31 // pred_region
          %182 = dma.done %s175, 5120
        $region36: #{tpu_custom_call.1} parent=31 // pred_fallthru
          _
        // Predicated region
        $region37: #{tpu_custom_call.1} parent=31 // pred_check
          %p183 = pneg %p63
        $region38: #{tpu_custom_call.1} parent=31 // pred_check_branch
          %185 = sbr.rel (%p183) target = $region40
        $region39: #{tpu_custom_call.1} parent=31 // pred_region
          %186 = dma.done [#allocation6], 4096
        $region40: #{tpu_custom_call.1} parent=31 // pred_fallthru
          _
        %s187 = sand.u32 %s29, 1
        %s188 = scalar_lea.sflag [#allocation3], %s187
        %s189 = sand.u32 %s29, 1
        %s190 = smul.addr %s189, 320
        %s191 = scalar_lea.vmem [#allocation2], %s190
        %p192 = pneg %p42
        %p193 = pneg %p39
        %p194 = pneg %p63
        %p195 = pneg %p60
        %p196 = pneg %p84
        %p197 = pneg %p81
        %p198 = pneg %p110
        %p199 = pneg %p107
        %s200 = sand.u32 %s97, 1
        %s201 = scalar_lea.sflag [#allocation4], %s200
        %s202 = sand.u32 %s97, 1
        %s203 = smul.addr %s202, 160
        %s204 = scalar_lea.vmem [#allocation7], %s203
        %s205 = smul.u32 20, %s21
        %s206 = smul.u32 20, %s21
        %v207 = vld [vmem:[%s178] sm:$0xff]
        %v208 = vld [vmem:[%s178 + $0x8] sm:$0xff]
        %v209 = vld [vmem:[%s178 + $0x10] sm:$0xff]
        %v210 = vld [vmem:[%s178 + $0x18] sm:$0xff]
        %v211 = vld [vmem:[%s178 + $0x20] sm:$0xff]
        %v212 = vld [vmem:[%s178 + $0x28] sm:$0xff]
        %v213 = vld [vmem:[%s178 + $0x30] sm:$0xff]
        %v214 = vld [vmem:[%s178 + $0x38] sm:$0xff]
        %v215 = vld [vmem:[%s178 + $0x40] sm:$0xff]
        %v216 = vld [vmem:[%s178 + $0x48] sm:$0xff]
        %v217 = vld [vmem:[%s178 + $0x50] sm:$0xff]
        %v218 = vld [vmem:[%s178 + $0x58] sm:$0xff]
        %v219 = vld [vmem:[%s178 + $0x60] sm:$0xff]
        %v220 = vld [vmem:[%s178 + $0x68] sm:$0xff]
        %v221 = vld [vmem:[%s178 + $0x70] sm:$0xff]
        %v222 = vld [vmem:[%s178 + $0x78] sm:$0xff]
        %v223 = vld [vmem:[%s178 + $0x80] sm:$0xff]
        %v224 = vld [vmem:[%s178 + $0x88] sm:$0xff]
        %v225 = vld [vmem:[%s178 + $0x90] sm:$0xff]
        %v226 = vld [vmem:[%s178 + $0x98] sm:$0xff]
        %v227 = vld [vmem:[%s178 + $0xa0] sm:$0xff]
        %v228 = vld [vmem:[%s178 + $0xa8] sm:$0xff]
        %v229 = vld [vmem:[%s178 + $0xb0] sm:$0xff]
        %v230 = vld [vmem:[%s178 + $0xb8] sm:$0xff]
        %v231 = vld [vmem:[%s178 + $0xc0] sm:$0xff]
        %v232 = vld [vmem:[%s178 + $0xc8] sm:$0xff]
        %v233 = vld [vmem:[%s178 + $0xd0] sm:$0xff]
        %v234 = vld [vmem:[%s178 + $0xd8] sm:$0xff]
        %v235 = vld [vmem:[%s178 + $0xe0] sm:$0xff]
        %v236 = vld [vmem:[%s178 + $0xe8] sm:$0xff]
        %v237 = vld [vmem:[%s178 + $0xf0] sm:$0xff]
        %v238 = vld [vmem:[%s178 + $0xf8] sm:$0xff]
        %v239 = vld [vmem:[%s178 + $0x100] sm:$0xff]
        %v240 = vld [vmem:[%s178 + $0x108] sm:$0xff]
        %v241 = vld [vmem:[%s178 + $0x110] sm:$0xff]
        %v242 = vld [vmem:[%s178 + $0x118] sm:$0xff]
        %v243 = vld [vmem:[%s178 + $0x120] sm:$0xff]
        %v244 = vld [vmem:[%s178 + $0x128] sm:$0xff]
        %v245 = vld [vmem:[%s178 + $0x130] sm:$0xff]
        %v246 = vld [vmem:[%s178 + $0x138] sm:$0xff]
        %v247 = vld [vmem:[#allocation5] sm:$0xff]
        %v248 = vld [vmem:[#allocation5 + $0x8] sm:$0xff]
        %v249 = vld [vmem:[#allocation5 + $0x10] sm:$0xff]
        %v250 = vld [vmem:[#allocation5 + $0x18] sm:$0xff]
        %v251 = vld [vmem:[#allocation5 + $0x20] sm:$0xff]
        %v252 = vld [vmem:[#allocation5 + $0x28] sm:$0xff]
        %v253 = vld [vmem:[#allocation5 + $0x30] sm:$0xff]
        %v254 = vld [vmem:[#allocation5 + $0x38] sm:$0xff]
        %v255 = vld [vmem:[#allocation5 + $0x40] sm:$0xff]
        %v256 = vld [vmem:[#allocation5 + $0x48] sm:$0xff]
        %v257 = vld [vmem:[#allocation5 + $0x50] sm:$0xff]
        %v258 = vld [vmem:[#allocation5 + $0x58] sm:$0xff]
        %v259 = vld [vmem:[#allocation5 + $0x60] sm:$0xff]
        %v260 = vld [vmem:[#allocation5 + $0x68] sm:$0xff]
        %v261 = vld [vmem:[#allocation5 + $0x70] sm:$0xff]
        %v262 = vld [vmem:[#allocation5 + $0x78] sm:$0xff]
        %v263 = vld [vmem:[#allocation5 + $0x80] sm:$0xff]
        %v264 = vld [vmem:[#allocation5 + $0x88] sm:$0xff]
        %v265 = vld [vmem:[#allocation5 + $0x90] sm:$0xff]
        %v266 = vld [vmem:[#allocation5 + $0x98] sm:$0xff]
        %v267 = vld [vmem:[#allocation5 + $0xa0] sm:$0xff]
        %v268 = vld [vmem:[#allocation5 + $0xa8] sm:$0xff]
        %v269 = vld [vmem:[#allocation5 + $0xb0] sm:$0xff]
        %v270 = vld [vmem:[#allocation5 + $0xb8] sm:$0xff]
        %v271 = vld [vmem:[#allocation5 + $0xc0] sm:$0xff]
        %v272 = vld [vmem:[#allocation5 + $0xc8] sm:$0xff]
        %v273 = vld [vmem:[#allocation5 + $0xd0] sm:$0xff]
        %v274 = vld [vmem:[#allocation5 + $0xd8] sm:$0xff]
        %v275 = vld [vmem:[#allocation5 + $0xe0] sm:$0xff]
        %v276 = vld [vmem:[#allocation5 + $0xe8] sm:$0xff]
        %v277 = vld [vmem:[#allocation5 + $0xf0] sm:$0xff]
        %v278 = vld [vmem:[#allocation5 + $0xf8] sm:$0xff]
        %v279 = vld [vmem:[%s2] sm:$0x1]
        %v281 = vlaneseq
        %v282 = vshrl.u32 %v281, 7
        %v283 = vsub.s32 0, %v282
        %v284 = vrot.slane %v279, %v283
        %286 = vmatprep.subr.mxu0 0.0
        %287 = vmatpush1.msra.mxu0 %v247
        %288 = vmatprep.subr.mxu0 0.0
        %289 = vmatpush1.msra.mxu0 %v248
        %290 = vmatprep.subr.mxu0 0.0
        %291 = vmatpush1.msra.mxu0 %v249
        %292 = vmatprep.subr.mxu0 0.0
        %293 = vmatpush1.msra.mxu0 %v250
        %294 = vmatprep.subr.mxu0 0.0
        %295 = vmatpush1.msra.mxu0 %v251
        %296 = vmatprep.subr.mxu0 0.0
        %297 = vmatpush1.msra.mxu0 %v252
        %298 = vmatprep.subr.mxu0 0.0
        %299 = vmatpush1.msra.mxu0 %v253
        %300 = vmatprep.subr.mxu0 0.0
        %301 = vmatpush1.msra.mxu0 %v254
        %302 = vmatprep.subr.mxu0 0.0
        %303 = vmatpush1.msra.mxu0 %v255
        %304 = vmatprep.subr.mxu0 0.0
        %305 = vmatpush1.msra.mxu0 %v256
        %306 = vmatprep.subr.mxu0 0.0
        %307 = vmatpush1.msra.mxu0 %v257
        %308 = vmatprep.subr.mxu0 0.0
        %309 = vmatpush1.msra.mxu0 %v258
        %310 = vmatprep.subr.mxu0 0.0
        %311 = vmatpush1.msra.mxu0 %v259
        %312 = vmatprep.subr.mxu0 0.0
        %313 = vmatpush1.msra.mxu0 %v260
        %314 = vmatprep.subr.mxu0 0.0
        %315 = vmatpush1.msra.mxu0 %v261
        %316 = vmatprep.subr.mxu0 0.0
        %317 = vmatpush1.msra.mxu0 %v262
        %318 = vmatprep.subr.mxu0 0.0
        %319 = vmatpush1.msra.mxu0 %v263
        %320 = vmatprep.subr.mxu0 0.0
        %321 = vmatpush1.msra.mxu0 %v264
        %322 = vmatprep.subr.mxu0 0.0
        %323 = vmatpush1.msra.mxu0 %v265
        %324 = vmatprep.subr.mxu0 0.0
        %325 = vmatpush1.msra.mxu0 %v266
        %326 = vmatprep.subr.mxu0 0.0
        %327 = vmatpush1.msra.mxu0 %v267
        %328 = vmatprep.subr.mxu0 0.0
        %329 = vmatpush1.msra.mxu0 %v268
        %330 = vmatprep.subr.mxu0 0.0
        %331 = vmatpush1.msra.mxu0 %v269
        %332 = vmatprep.subr.mxu0 0.0
        %333 = vmatpush1.msra.mxu0 %v270
        %334 = vmatprep.subr.mxu0 0.0
        %335 = vmatpush1.msra.mxu0 %v271
        %336 = vmatprep.subr.mxu0 0.0
        %337 = vmatpush1.msra.mxu0 %v272
        %338 = vmatprep.subr.mxu0 0.0
        %339 = vmatpush1.msra.mxu0 %v273
        %340 = vmatprep.subr.mxu0 0.0
        %341 = vmatpush1.msra.mxu0 %v274
        %342 = vmatprep.subr.mxu0 0.0
        %343 = vmatpush1.msra.mxu0 %v275
        %344 = vmatprep.subr.mxu0 0.0
        %345 = vmatpush1.msra.mxu0 %v276
        %346 = vmatprep.subr.mxu0 0.0
        %347 = vmatpush1.msra.mxu0 %v277
        %348 = vmatprep.subr.mxu0 0.0
        %349 = vmatpush1.msra.mxu0 %v278
        %350 = vmatprep.mubr.f32.mxu0 %v208
        %351 = vmatmul.mubr.f32.gmra.mrb[0].mxu0 %v207
        %v352 = vpop.f32.mrb[0].mxu0
        %v353 = vadd.f32 %v284, %v352
        %v354 = vpop.f32.mrb[0].mxu0
        %355 = vmatprep.mubr.f32.mxu0 %v210
        %356 = vmatmul.mubr.f32.gmra.mrb[0].mxu0 %v209
        %v357 = vpop.f32.mrb[0].mxu0
        %v358 = vadd.f32 %v284, %v357
        %v359 = vpop.f32.mrb[0].mxu0
        %360 = vmatprep.mubr.f32.mxu0 %v212
        %361 = vmatmul.mubr.f32.gmra.mrb[0].mxu0 %v211
        %v362 = vpop.f32.mrb[0].mxu0
        %v363 = vadd.f32 %v284, %v362
        %v364 = vpop.f32.mrb[0].mxu0
        %365 = vmatprep.mubr.f32.mxu0 %v214
        %366 = vmatmul.mubr.f32.gmra.mrb[0].mxu0 %v213
        %v367 = vpop.f32.mrb[0].mxu0
        %v368 = vadd.f32 %v284, %v367
        %v369 = vpop.f32.mrb[0].mxu0
        %370 = vmatprep.mubr.f32.mxu0 %v216
        %371 = vmatmul.mubr.f32.gmra.mrb[0].mxu0 %v215
        %v372 = vpop.f32.mrb[0].mxu0
        %v373 = vadd.f32 %v284, %v372
        %v374 = vpop.f32.mrb[0].mxu0
        %375 = vmatprep.mubr.f32.mxu0 %v218
        %376 = vmatmul.mubr.f32.gmra.mrb[0].mxu0 %v217
        %v377 = vpop.f32.mrb[0].mxu0
        %v378 = vadd.f32 %v284, %v377
        %v379 = vpop.f32.mrb[0].mxu0
        %380 = vmatprep.mubr.f32.mxu0 %v220
        %381 = vmatmul.mubr.f32.gmra.mrb[0].mxu0 %v219
        %v382 = vpop.f32.mrb[0].mxu0
        %v383 = vadd.f32 %v284, %v382
        %v384 = vpop.f32.mrb[0].mxu0
        %385 = vmatprep.mubr.f32.mxu0 %v222
        %386 = vmatmul.mubr.f32.gmra.mrb[0].mxu0 %v221
        %v387 = vpop.f32.mrb[0].mxu0
        %v388 = vadd.f32 %v284, %v387
        %v389 = vpop.f32.mrb[0].mxu0
        %390 = vmatprep.mubr.f32.mxu0 %v224
        %391 = vmatmul.mubr.f32.gmra.mrb[0].mxu0 %v223
        %v392 = vpop.f32.mrb[0].mxu0
        %v393 = vadd.f32 %v284, %v392
        %v394 = vpop.f32.mrb[0].mxu0
        %395 = vmatprep.mubr.f32.mxu0 %v226
        %396 = vmatmul.mubr.f32.gmra.mrb[0].mxu0 %v225
        %v397 = vpop.f32.mrb[0].mxu0
        %v398 = vadd.f32 %v284, %v397
        %v399 = vpop.f32.mrb[0].mxu0
        %400 = vmatprep.mubr.f32.mxu0 %v228
        %401 = vmatmul.mubr.f32.gmra.mrb[0].mxu0 %v227
        %v402 = vpop.f32.mrb[0].mxu0
        %v403 = vadd.f32 %v284, %v402
        %v404 = vpop.f32.mrb[0].mxu0
        %405 = vmatprep.mubr.f32.mxu0 %v230
        %406 = vmatmul.mubr.f32.gmra.mrb[0].mxu0 %v229
        %v407 = vpop.f32.mrb[0].mxu0
        %v408 = vadd.f32 %v284, %v407
        %v409 = vpop.f32.mrb[0].mxu0
        %410 = vmatprep.mubr.f32.mxu0 %v232
        %411 = vmatmul.mubr.f32.gmra.mrb[0].mxu0 %v231
        %v412 = vpop.f32.mrb[0].mxu0
        %v413 = vadd.f32 %v284, %v412
        %v414 = vpop.f32.mrb[0].mxu0
        %415 = vmatprep.mubr.f32.mxu0 %v234
        %416 = vmatmul.mubr.f32.gmra.mrb[0].mxu0 %v233
        %v417 = vpop.f32.mrb[0].mxu0
        %v418 = vadd.f32 %v284, %v417
        %v419 = vpop.f32.mrb[0].mxu0
        %420 = vmatprep.mubr.f32.mxu0 %v236
        %421 = vmatmul.mubr.f32.gmra.mrb[0].mxu0 %v235
        %v422 = vpop.f32.mrb[0].mxu0
        %v423 = vadd.f32 %v284, %v422
        %v424 = vpop.f32.mrb[0].mxu0
        %425 = vmatprep.mubr.f32.mxu0 %v238
        %426 = vmatmul.mubr.f32.gmra.mrb[0].mxu0 %v237
        %v427 = vpop.f32.mrb[0].mxu0
        %v428 = vadd.f32 %v284, %v427
        %v429 = vpop.f32.mrb[0].mxu0
        %430 = vmatprep.mubr.f32.mxu0 %v240
        %431 = vmatmul.mubr.f32.gmra.mrb[0].mxu0 %v239
        %v432 = vpop.f32.mrb[0].mxu0
        %v433 = vadd.f32 %v284, %v432
        %v434 = vpop.f32.mrb[0].mxu0
        %435 = vmatprep.mubr.f32.mxu0 %v242
        %436 = vmatmul.mubr.f32.gmra.mrb[0].mxu0 %v241
        %v437 = vpop.f32.mrb[0].mxu0
        %v438 = vadd.f32 %v284, %v437
        %v439 = vpop.f32.mrb[0].mxu0
        %440 = vmatprep.mubr.f32.mxu0 %v244
        %441 = vmatmul.mubr.f32.gmra.mrb[0].mxu0 %v243
        %v442 = vpop.f32.mrb[0].mxu0
        %v443 = vadd.f32 %v284, %v442
        %v444 = vpop.f32.mrb[0].mxu0
        %445 = vmatprep.mubr.f32.mxu0 %v246
        %446 = vmatmul.mubr.f32.gmra.mrb[0].mxu0 %v245
        %v447 = vpop.f32.mrb[0].mxu0
        %v448 = vadd.f32 %v284, %v447
        %v449 = vpop.f32.mrb[0].mxu0
        %450 = vdwg.mxu0
        %v451 = vmax.f32 %v353, 0.0
        %v452 = vmax.f32 %v358, 0.0
        %v453 = vmax.f32 %v363, 0.0
        %v454 = vmax.f32 %v368, 0.0
        %v455 = vmax.f32 %v373, 0.0
        %v456 = vmax.f32 %v378, 0.0
        %v457 = vmax.f32 %v383, 0.0
        %v458 = vmax.f32 %v388, 0.0
        %v459 = vmax.f32 %v393, 0.0
        %v460 = vmax.f32 %v398, 0.0
        %v461 = vmax.f32 %v403, 0.0
        %v462 = vmax.f32 %v408, 0.0
        %v463 = vmax.f32 %v413, 0.0
        %v464 = vmax.f32 %v418, 0.0
        %v465 = vmax.f32 %v423, 0.0
        %v466 = vmax.f32 %v428, 0.0
        %v467 = vmax.f32 %v433, 0.0
        %v468 = vmax.f32 %v438, 0.0
        %v469 = vmax.f32 %v443, 0.0
        %v470 = vmax.f32 %v448, 0.0
        %471 = vst [vmem:[%s204] sm:$0xff] %v451
        %472 = vst [vmem:[%s204 + $0x8] sm:$0xff] %v452
        %473 = vst [vmem:[%s204 + $0x10] sm:$0xff] %v453
        %474 = vst [vmem:[%s204 + $0x18] sm:$0xff] %v454
        %475 = vst [vmem:[%s204 + $0x20] sm:$0xff] %v455
        %476 = vst [vmem:[%s204 + $0x28] sm:$0xff] %v456
        %477 = vst [vmem:[%s204 + $0x30] sm:$0xff] %v457
        %478 = vst [vmem:[%s204 + $0x38] sm:$0xff] %v458
        %479 = vst [vmem:[%s204 + $0x40] sm:$0xff] %v459
        %480 = vst [vmem:[%s204 + $0x48] sm:$0xff] %v460
        %481 = vst [vmem:[%s204 + $0x50] sm:$0xff] %v461
        %482 = vst [vmem:[%s204 + $0x58] sm:$0xff] %v462
        %483 = vst [vmem:[%s204 + $0x60] sm:$0xff] %v463
        %484 = vst [vmem:[%s204 + $0x68] sm:$0xff] %v464
        %485 = vst [vmem:[%s204 + $0x70] sm:$0xff] %v465
        %486 = vst [vmem:[%s204 + $0x78] sm:$0xff] %v466
        %487 = vst [vmem:[%s204 + $0x80] sm:$0xff] %v467
        %488 = vst [vmem:[%s204 + $0x88] sm:$0xff] %v468
        %489 = vst [vmem:[%s204 + $0x90] sm:$0xff] %v469
        %490 = vst [vmem:[%s204 + $0x98] sm:$0xff] %v470
        %s491 = sand.u32 %s97, 1
        %s492 = scalar_lea.sflag [#allocation4], %s491
        %s493 = sand.u32 %s97, 1
        %s494 = smul.addr %s493, 160
        %s495 = scalar_lea.vmem [#allocation7], %s494
        // Predicated region
        $region41: #{tpu_custom_call.1} parent=31 // pred_check
          %p496 = pneg %p107
        $region42: #{tpu_custom_call.1} parent=31 // pred_check_branch
          %498 = sbr.rel (%p496) target = $region44
        $region43: #{tpu_custom_call.1} parent=31 // pred_region
          %s499 = smul.u32 20, %s21
          %s501 = ssub.s32 2560, 2560
          %502 = vsyncadd %s492, %s501
          %s503 = smul.addr %s499, 128
          %s504 = scalar_lea.hbm %s3, %s503
          %s505 = sshll.u32 %s495, 4
          %s506 = int_to_ptr.vmem [resolvable:$true] %s505
          %511 = dma.vmem_to_hbm [thread:$0]  %s506, 2560, %s504, %s492, 128, 128, 8
        $region44: #{tpu_custom_call.1} parent=31 // pred_fallthru
          _
      $region32: #{tpu_custom_call.1} parent=5 // pred_fallthru
        _
      %p512 = scmp.le.s32.totalorder 2, %s16
      // Predicated region
      $region45: #{tpu_custom_call.1} parent=5 // pred_check
        %p513 = pneg %p512
      $region46: #{tpu_custom_call.1} parent=5 // pred_check_branch
        %515 = sbr.rel (%p513) target = $region48
      $region47: #{tpu_custom_call.1} parent=5 // pred_region
        %s516 = ssub.s32 %s16, 2
        // Predicated region
        $region49: #{tpu_custom_call.1} parent=47 // pred_check
          %p517 = pneg %p113
        $region50: #{tpu_custom_call.1} parent=47 // pred_check_branch
          %519 = sbr.rel (%p517) target = $region52
        $region51: #{tpu_custom_call.1} parent=47 // pred_region
          %s520 = sand.u32 %s98, 1
          %s521 = scalar_lea.sflag [#allocation4], %s520
          %s522 = sand.u32 %s98, 1
          %s523 = smul.addr %s522, 160
          %s524 = scalar_lea.vmem [#allocation7], %s523
          %525 = dma.done %s521, 2560
        $region52: #{tpu_custom_call.1} parent=47 // pred_fallthru
          _
      $region48: #{tpu_custom_call.1} parent=5 // pred_fallthru
        _
    $region6: #{tpu_custom_call.1} parent=1 // loop_footer
      %s20 = sadd.s32 1, %s16
    $region7: #{tpu_custom_call.1} parent=1 // loop_footer_branch
      %15 = sbr.rel target = $region3
    $region8: #{tpu_custom_call.1} parent=1 // loop_exit
      _
    %526 = vsyncpa [#allocation3], 1
    %s527 = scalar_lea.sflag [#allocation3], 1
    %528 = vsyncpa %s527, 1
    %529 = vsyncpa [#allocation6], 1
    %530 = vsyncpa [#allocation4], 1
    %s531 = scalar_lea.sflag [#allocation4], 1
    %532 = vsyncpa %s531, 1

</llo_original>
